<compile_context>
chip_gen: v5e
topology: v5e:2x2
jax: 0.10.0
libtpu: 0.0.40
codegen_flags: <defaults>
</compile_context>

<pallas_src>
import functools

import numpy as np
import jax
import jax.numpy as jnp
from jax.experimental import pallas as pl
from jax.experimental.pallas import tpu as pltpu


def block_kernel(x_ref,
                 w1_ref, b1_ref, w2_ref, b2_ref, w3_ref, b3_ref,
                 wc1_ref, bc1_ref, wc2_ref, bc2_ref, wc3_ref, bc3_ref,
                 o_ref, *, H, W, roll_like_numpy):
    x = x_ref[...]                       # (C, L) f32, L = N*H*W
    C, L = x.shape
    HW = H * W

    # Per-lane spatial coordinates (identical for every image since each
    # image occupies a contiguous HW block of lanes).
    lane = jax.lax.broadcasted_iota(jnp.int32, (C, L), 1)
    pos = lane % HW
    hh = pos // W
    ww = pos % W

    # 9 taps of the 3x3 kernel, ordered k = (di+1)*3 + (dj+1) == kh*3 + kw
    # to match the PyTorch (cross-correlation) weight layout.
    taps = []
    for di in (-1, 0, 1):
        for dj in (-1, 0, 1):
            valid = ((hh + di >= 0) & (hh + di < H)
                     & (ww + dj >= 0) & (ww + dj < W))
            taps.append((di * W + dj, valid))

    def shift_tap(v, off, valid):
        # out[:, p] = v[:, p + off] if the source pixel lies inside the same
        # image row/column range, else 0.  A circular lane roll is correct
        # because any lane whose source crosses a row/image boundary is
        # exactly one of the masked lanes.
        if off == 0:
            return v
        amt = (-off) % L if roll_like_numpy else off % L
        s = pltpu.roll(v, amt, axis=1)
        return jnp.where(valid, s, 0.0)

    def conv3x3(v, w_ref, b_ref):
        # single (C, 9C) @ (9C, L) bf16 matmul over the tap-stacked slab
        pieces = [shift_tap(v, off, valid) for off, valid in taps]
        stacked = jnp.concatenate(pieces, axis=0).astype(jnp.bfloat16)
        out = jnp.dot(w_ref[...], stacked, preferred_element_type=jnp.float32)
        return out + b_ref[...]

    def conv1x1(pieces, w_ref, b_ref):
        # 1x1 conv over channel-concat == single (C, nC) @ (nC, L) matmul
        cat = jnp.concatenate(pieces, axis=0).astype(jnp.bfloat16)
        out = jnp.dot(w_ref[...], cat, preferred_element_type=jnp.float32)
        return out + b_ref[...]

    relu = lambda t: jnp.maximum(t, 0.0)

    def eresidual(v):                    # EResidualBlock(nf, nf)
        h = relu(conv3x3(v, w1_ref, b1_ref))
        h = relu(conv3x3(h, w2_ref, b2_ref))
        h = conv1x1([h], w3_ref, b3_ref)
        return relu(h + v)

    b1v = eresidual(x)                                        # b1 = b1(o0)
    o1 = relu(conv1x1([x, b1v], wc1_ref, bc1_ref))            # c1 = [x, b1]
    b2v = eresidual(o1)
    o2 = relu(conv1x1([x, b1v, b2v], wc2_ref, bc2_ref))       # c2 = [c1, b2]
    b3v = eresidual(o2)
    o3 = relu(conv1x1([x, b1v, b2v, b3v], wc3_ref, bc3_ref))  # c3 = [c2, b3]
    o_ref[...] = o3


@functools.lru_cache(maxsize=None)
def _pltpu_roll_matches_numpy():
    """Probe pltpu.roll's sign convention once (tiny one-off kernel)."""
    def probe(x_ref, o_ref):
        o_ref[...] = pltpu.roll(x_ref[...], 1, axis=1)

    x = jnp.arange(8 * 128, dtype=jnp.float32).reshape(8, 128)
    out = pl.pallas_call(
        probe, out_shape=jax.ShapeDtypeStruct((8, 128), jnp.float32))(x)
    return bool(jnp.array_equal(out, jnp.roll(x, 1, axis=1)))


def carn_block_pallas(x_nchw, p):
    N, C, H, W = x_nchw.shape
    L = N * H * W

    # (N, C, H, W) -> (C, N*H*W): channels on sublanes, batch folded into lanes.
    x = jnp.transpose(x_nchw, (1, 0, 2, 3)).reshape(C, L).astype(jnp.float32)

    def w3x3(w):   # (Cout, Cin, 3, 3) -> (Cout, 9*Cin); col = (kh*3+kw)*Cin + ci
        return jnp.transpose(w, (0, 2, 3, 1)).reshape(C, 9 * C).astype(jnp.bfloat16)

    def w1x1(w):   # (Cout, n*Cin, 1, 1) -> (Cout, n*Cin)
        return w[:, :, 0, 0].astype(jnp.bfloat16)

    def bias(b):   # lane-dense f32 bias slab
        return jnp.broadcast_to(b.reshape(C, 1), (C, L)).astype(jnp.float32)

    weight_args = [
        w3x3(p['w1']), bias(p['b1']),
        w3x3(p['w2']), bias(p['b2']),
        w1x1(p['w3']), bias(p['b3']),
        w1x1(p['wc1']), bias(p['bc1']),
        w1x1(p['wc2']), bias(p['bc2']),
        w1x1(p['wc3']), bias(p['bc3']),
    ]

    kernel = functools.partial(
        block_kernel, H=H, W=W, roll_like_numpy=_pltpu_roll_matches_numpy())

    vmem = pl.BlockSpec(memory_space=pltpu.MemorySpace.VMEM)
    out = pl.pallas_call(
        kernel,
        out_shape=jax.ShapeDtypeStruct((C, L), jnp.float32),
        in_specs=[vmem] * (1 + len(weight_args)),
        out_specs=vmem,
    )(x, *weight_args)
    return jnp.transpose(out.reshape(C, N, H, W), (1, 0, 2, 3))


# ----------------------- numpy reference (NCHW, like PyTorch) ----------------
def conv2d_ref(x, w, b, pad):
    N, Cin, H, W = x.shape
    Cout, _, kh, kw = w.shape
    xp = np.pad(x, ((0, 0), (0, 0), (pad, pad), (pad, pad)))
    out = np.zeros((N, Cout, H, W), np.float64)
    for i in range(kh):
        for j in range(kw):
            patch = xp[:, :, i:i + H, j:j + W]
            out += np.einsum('nchw,oc->nohw', patch, w[:, :, i, j])
    return out + b.reshape(1, -1, 1, 1)


def block_ref(x, p):
    def eres(v):
        h = np.maximum(conv2d_ref(v, p['w1'], p['b1'], 1), 0)
        h = np.maximum(conv2d_ref(h, p['w2'], p['b2'], 1), 0)
        h = conv2d_ref(h, p['w3'], p['b3'], 0)
        return np.maximum(h + v, 0)

    def bb(v, w, b):
        return np.maximum(conv2d_ref(v, w, b, 0), 0)

    c0 = o0 = x
    b1 = eres(o0)
    c1 = np.concatenate([c0, b1], axis=1)
    o1 = bb(c1, p['wc1'], p['bc1'])
    b2 = eres(o1)
    c2 = np.concatenate([c1, b2], axis=1)
    o2 = bb(c2, p['wc2'], p['bc2'])
    b3 = eres(o2)
    c3 = np.concatenate([c2, b3], axis=1)
    o3 = bb(c3, p['wc3'], p['bc3'])
    return o3


if __name__ == "__main__":
    N, nf, H, W = 2, 8, 16, 16   # x: (N, nf, H, W)  NCHW, group=1
    key = jax.random.PRNGKey(0)
    ks = jax.random.split(key, 14)

    def nrm(k, shape, scale=0.1):
        return jax.random.normal(k, shape, jnp.float32) * scale

    params = {
        'w1':  nrm(ks[0], (nf, nf, 3, 3)),        'b1':  nrm(ks[1], (nf,), 0.05),
        'w2':  nrm(ks[2], (nf, nf, 3, 3)),        'b2':  nrm(ks[3], (nf,), 0.05),
        'w3':  nrm(ks[4], (nf, nf, 1, 1)),        'b3':  nrm(ks[5], (nf,), 0.05),
        'wc1': nrm(ks[6], (nf, 2 * nf, 1, 1)),    'bc1': nrm(ks[7], (nf,), 0.05),
        'wc2': nrm(ks[8], (nf, 3 * nf, 1, 1)),    'bc2': nrm(ks[9], (nf,), 0.05),
        'wc3': nrm(ks[10], (nf, 4 * nf, 1, 1)),   'bc3': nrm(ks[11], (nf,), 0.05),
    }
    x = jax.random.normal(ks[12], (N, nf, H, W), jnp.float32)

    out = carn_block_pallas(x, params)
    out = jax.block_until_ready(out)

    p_np = {k: np.asarray(v, np.float64) for k, v in params.items()}
    ref = block_ref(np.asarray(x, np.float64), p_np)
    # bf16 MXU operands (f32 accumulation) -> slightly looser tolerance
    np.testing.assert_allclose(np.asarray(out), ref, rtol=2e-2, atol=2e-2)

    print("KERNEL_OK")
</pallas_src>

<mosaic_0001>
module attributes {stable_mosaic.version = 11 : i64} {
  func.func @probe(%arg0: memref<8x128xf32, #tpu.memory_space<vmem>>, %arg1: memref<8x128xf32, #tpu.memory_space<vmem>>) attributes {dimension_semantics = [], scalar_prefetch = 0 : i64, scratch_operands = 0 : i64, tpu.core_type = #tpu.core_type<tc>} {
    %c0 = arith.constant 0 : index
    %c0_0 = arith.constant 0 : index
    %0 = vector.load %arg0[%c0, %c0_0] : memref<8x128xf32, #tpu.memory_space<vmem>>, vector<8x128xf32>
    %c1_i32 = arith.constant 1 : i32
    %1 = tpu.dynamic_rotate %0 by %c1_i32 dim 1 : vector<8x128xf32>, i32 -> vector<8x128xf32>
    %c0_1 = arith.constant 0 : index
    %c0_2 = arith.constant 0 : index
    %2 = vector.load %arg1[%c0_1, %c0_2] : memref<8x128xf32, #tpu.memory_space<vmem>>, vector<8x128xf32>
    tpu.vector_store %arg1[%c0_1, %c0_2], %1 {strides = array<i32>} : memref<8x128xf32, #tpu.memory_space<vmem>>, vector<8x128xf32>,
    return
  }
}

</mosaic_0001>

<llo_original>
// kernel: tpu_custom_call.1
$region0: #{tpu_custom_call.1}
  #allocation0 [shape = 'u32[]', space=smem, size = 0x4, offset = 0x4, fixed_abs, tag = 'smem constant byte address 0x4 - core index']
  #allocation1 [shape = 'u32[72,128]{1,0:T(1,128)}', space=vmem, size = 0x9000, scoped, tag = 'internal scratch']
  %s0 = inlined_call_operand.hbm [shape: f32[8,128], index: 0, kind: input, shape index: {}]
  %s1 = inlined_call_operand.hbm [shape: f32[8,128], index: 1, kind: output, shape index: {}]
  %s2 = sld [smem:[#allocation0]]
  $region18: #{tpu_custom_call.1} parent=0
    _
  %s4 = ssub.s32 1, %s2
  %s5 = scalar_select 0, %s4, %s2
  $region1: #{tpu_custom_call.1} parent=0
    #allocation2 [shape = 'u8[4096]{0}', space=vmem, size = 0x1000, scoped, tag = 'input window, operand 0, single buffered']
    #allocation3 [shape = 's32[1]{0}', space=sflag, size = 0x4, scoped, tag = 'scoped memory for tpu_custom_call.1']
    #allocation4 [shape = 's32[1]{0}', space=sflag, size = 0x4, scoped, tag = 'scoped memory for tpu_custom_call.1']
    #allocation5 [shape = 'u8[4096]{0}', space=vmem, size = 0x1000, scoped, tag = 'output window, operand 0, single buffered']
    %6 = vsyncpa [#allocation3], 0
    %7 = vsyncpa [#allocation4], 0
    // Predicated region
    $region2: #{tpu_custom_call.1} parent=1 // pred_check
      _
    $region3: #{tpu_custom_call.1} parent=1 // pred_check_branch
      %9 = sbr.rel (0) target = $region5
    $region4: #{tpu_custom_call.1} parent=1 // pred_region
      %11 = vsyncadd [#allocation3], 0
      %s13 = sshll.u32 %s0, 4
      %s14 = int_to_ptr.hbm [resolvable:$true] %s13
      %s15 = sshll.u32 [#allocation2], 4
      %s16 = int_to_ptr.vmem [resolvable:$true] %s15
      %18 = dma.hbm_to_vmem [thread:$0]  %s14, 128, %s16, [#allocation3]
    $region5: #{tpu_custom_call.1} parent=1 // pred_fallthru
      _
    // Predicated region
    $region6: #{tpu_custom_call.1} parent=1 // pred_check
      _
    $region7: #{tpu_custom_call.1} parent=1 // pred_check_branch
      %20 = sbr.rel (0) target = $region9
    $region8: #{tpu_custom_call.1} parent=1 // pred_region
      %22 = dma.done [#allocation3], 128
    $region9: #{tpu_custom_call.1} parent=1 // pred_fallthru
      _
    %v23 = vld [vmem:[#allocation2] sm:$0xff]
    %24 = vrot.lane.b32.xlu0 %v23, 1
    %v25 = vpop.permute.xlu0 %24
    %26 = vst [vmem:[#allocation5] sm:$0xff] %v25
    // Predicated region
    $region10: #{tpu_custom_call.1} parent=1 // pred_check
      _
    $region11: #{tpu_custom_call.1} parent=1 // pred_check_branch
      %28 = sbr.rel (0) target = $region13
    $region12: #{tpu_custom_call.1} parent=1 // pred_region
      %30 = vsyncadd [#allocation4], 0
      %s32 = sshll.u32 [#allocation5], 4
      %s33 = int_to_ptr.vmem [resolvable:$true] %s32
      %s34 = sshll.u32 %s1, 4
      %s35 = int_to_ptr.hbm [resolvable:$true] %s34
      %37 = dma.vmem_to_hbm [thread:$0]  %s33, 128, %s35, [#allocation4]
    $region13: #{tpu_custom_call.1} parent=1 // pred_fallthru
      _
    // Predicated region
    $region14: #{tpu_custom_call.1} parent=1 // pred_check
      _
    $region15: #{tpu_custom_call.1} parent=1 // pred_check_branch
      %39 = sbr.rel (0) target = $region17
    $region16: #{tpu_custom_call.1} parent=1 // pred_region
      %41 = dma.done [#allocation4], 128
    $region17: #{tpu_custom_call.1} parent=1 // pred_fallthru
      _
    %42 = vsyncpa [#allocation3], 1
    %43 = vsyncpa [#allocation4], 1

</llo_original>
